<compile_context>
chip_gen: v7x
topology: tpu7x:2x2x1
jax: 0.10.0
libtpu: 0.0.40
codegen_flags: <defaults>
</compile_context>

<pallas_src>
import functools

import jax
import jax.numpy as jnp
import numpy as np
from jax.experimental import pallas as pl
from jax.experimental.pallas import tpu as pltpu


# ----------------------------------------------------------------------------
# Chip-aware knobs
# ----------------------------------------------------------------------------
def _vmem_limit_bytes():
    """~3/4 of physical VMEM when queryable (v5e/v6e: 128 MiB, v7x: 64 MiB)."""
    try:
        return int(pltpu.get_tpu_info().vmem_capacity_bytes * 3 // 4)
    except Exception:
        return 48 * 1024 * 1024          # safe even for v7x (64 MiB physical)


def _elementwise_dtype():
    """bf16 elementwise softmax math on chips with a bf16 VPU/EUP (v6e/v7x);
    f32 on v5e (no bf16 VPU/EUP) and unknown targets."""
    try:
        kind = jax.devices()[0].device_kind.lower()
    except Exception:
        return jnp.float32
    if any(tag in kind for tag in ("v6", "v7", "7x", "trillium")):
        return jnp.bfloat16
    return jnp.float32


# ----------------------------------------------------------------------------
# Tile selection (VMEM-budget driven)
# ----------------------------------------------------------------------------
def _divisor_tiles(n, mult):
    """Tile sizes dividing n that are multiples of `mult`, descending."""
    ts = [t for t in range(mult, n + 1, mult) if n % t == 0]
    return sorted(ts, reverse=True)


def _pick_row_tile(n, target=1024):
    """Kernel-1 node-row tile: multiple of 16; >=2 tiles when possible."""
    if n >= 32:
        target = min(target, n // 2)
    cands = [t for t in _divisor_tiles(n, 16) if t <= target]
    return cands[0] if cands else n


def _pick_src_tile(n, target=1024):
    """Src tile: multiple of 128 (lane-aligned DMA) dividing n, else full."""
    if n <= target:
        return n
    for t in range(target, 127, -1):
        if n % t == 0 and t % 128 == 0:
            return t
    return n


def _kernel2_bytes(tile_dst, tile_src, num_heads, d1, hd, ncls, elem_bytes):
    """Rough per-step VMEM footprint of kernel 2 (double-buffered inputs,
    scratch accumulators, (T, Ts) elementwise temporaries)."""
    adj = 2 * tile_dst * tile_src * 1                 # int8, double-buffered
    elt = 2 * num_heads * tile_src * 4                # el^T f32
    ft = 2 * num_heads * tile_src * d1 * 2            # bf16 [feat_h | 1] slabs
    er = 2 * tile_dst * num_heads * 4
    out = 2 * tile_dst * ncls * 4
    scr = num_heads * tile_dst * (d1 + 1) * 4         # online-softmax scratch
    wts = hd * ncls * 2 + ncls * 4
    tmp = 4 * tile_dst * tile_src * elem_bytes        # e / p / mask live temps
    return adj + elt + ft + er + out + scr + wts + tmp


def _pick_dst_tile(n, tile_src, num_heads, d1, hd, ncls, elem_bytes, budget,
                   target=512):
    """Largest dst tile (multiple of 16, dividing n, >=2 tiles for megacore)
    whose kernel-2 footprint fits the VMEM budget."""
    if n >= 32:
        target = min(target, n // 2)      # >=2 dst tiles -> both TCs on v7x
    cands = [t for t in _divisor_tiles(n, 16) if t <= target]
    if not cands:
        cands = [n]
    for t in cands:
        if _kernel2_bytes(t, tile_src, num_heads, d1, hd, ncls, elem_bytes) <= budget:
            return t
    return cands[-1]                      # best effort (smallest candidate)


# ----------------------------------------------------------------------------
# Kernel 1: folded input projection + batched per-head attention dots.
#           Grid over node-row tiles ("parallel").
# ----------------------------------------------------------------------------
def feat_attn_kernel(xin_ref, degc_ref, win_ref, alr_ref, bfold_ref,
                     feat_ref, elr_ref):
    # ONE matmul for [logits | features] against the stacked folded weight.
    acc = jnp.dot(xin_ref[...], win_ref[...], preferred_element_type=jnp.float32)
    acc = acc + degc_ref[...].astype(jnp.float32) + bfold_ref[...].astype(jnp.float32)
    feat_bf = acc.astype(jnp.bfloat16)
    feat_ref[...] = feat_bf
    # [A_l | A_r] is block-diagonal (hd, 2H): el/er for every head in ONE matmul.
    elr_ref[...] = jnp.dot(feat_bf, alr_ref[...], preferred_element_type=jnp.float32)


# ----------------------------------------------------------------------------
# Kernel 2: masked online edge-softmax + aggregation + fused final projection.
#           Grid: (dst tiles "parallel", src tiles "arbitrary").
# ----------------------------------------------------------------------------
def gat_agg_kernel(adj_ref, elT_ref, er_ref, feat_ref, wfin_ref, bout_ref,
                   o_ref, m_sc, acc_sc, *, num_heads, head_dim, negative_slope,
                   elem_dtype):
    j = pl.program_id(1)
    n_src = pl.num_programs(1)
    E = elem_dtype
    bf16 = jnp.bfloat16
    D = head_dim

    @pl.when(j == 0)
    def _():
        m_sc[...] = jnp.full_like(m_sc, -jnp.inf)
        acc_sc[...] = jnp.zeros_like(acc_sc)

    # Additive edge mask built in-kernel from the int8 adjacency tile
    # (adj never feeds the MXU, so it is shipped as 1 byte / edge).
    adj_t = adj_ref[...].astype(E)                                   # 0.0 / 1.0
    neg_bias = (adj_t - jnp.asarray(1.0, E)) * jnp.asarray(1e9, E)   # 0 / -1e9
    el = elT_ref[...].astype(E)                                      # (H, Ts) src terms
    er = er_ref[...].astype(E)                                       # (T, H)  dst terms

    # H is tiny (2) -> static unroll of the head loop.
    for h in range(num_heads):
        e = er[:, h:h + 1] + el[h:h + 1, :]                          # (T, Ts)
        e = jnp.where(e >= 0, e, e * jnp.asarray(negative_slope, E)) # LeakyReLU
        e = e + neg_bias                                             # mask non-edges
        # --- flash-style online softmax over src tiles ---
        m_prev = m_sc[h]                                             # (T, 1) f32
        m_tile = jnp.max(e, axis=1, keepdims=True).astype(jnp.float32)
        m_new = jnp.maximum(m_prev, m_tile)                          # always finite
        scale = jnp.exp(m_prev - m_new)                              # (T, 1) f32
        p = jnp.exp(e - m_new.astype(E))                             # (T, Ts), <= 1
        # feat_ref[h] is [feat_h | 1]: one MXU matmul yields [agg | rowsum],
        # i.e. the softmax denominator rides on otherwise idle MXU columns.
        part = jnp.dot(p.astype(bf16), feat_ref[h],
                       preferred_element_type=jnp.float32)           # (T, D+1)
        acc_sc[h] = scale * acc_sc[h] + part
        m_sc[h] = m_new

    @pl.when(j == n_src - 1)
    def _():
        outs = []
        for h in range(num_heads):
            acc = acc_sc[h]                                          # (T, D+1)
            inv = pl.reciprocal(acc[:, D:D + 1], approx=True)        # 1 / rowsum
            outs.append(acc[:, :D] * inv)
        rst = jnp.concatenate(outs, axis=1).astype(bf16)             # (T, H*D)
        # Single epilogue matmul; GATConv bias pre-folded through w_fin (b_out).
        o_ref[...] = (jnp.dot(rst, wfin_ref[...],
                              preferred_element_type=jnp.float32) + bout_ref[...])


# ----------------------------------------------------------------------------
# Wrapper
# ----------------------------------------------------------------------------
def gat_gets_forward(params, adj, logits, features, degrees, *, num_heads):
    n, c = logits.shape
    hd = params["w_fc"].shape[1]
    d = hd // num_heads
    d1 = d + 1
    f_hid = params["w_pf"].shape[1]
    num_classes = params["w_fin"].shape[1]
    bf16 = jnp.bfloat16

    elem_dtype = _elementwise_dtype()
    elem_bytes = jnp.dtype(elem_dtype).itemsize
    vmem_limit = _vmem_limit_bytes()
    budget = int(vmem_limit * 0.7)        # leave headroom for compiler scratch

    # --- algebraic weight folding (tiny, once, outside the hot kernels) ------
    w_fc = params["w_fc"]
    w_lg = w_fc[:c, :]                                     # logits    -> hidden
    w_f = w_fc[c:c + f_hid, :]                             # proj_feat -> hidden
    w_d = w_fc[c + f_hid:, :]                              # deg embed -> hidden
    w_in = jnp.concatenate([w_lg, params["w_pf"] @ w_f], axis=0)   # (c+fdim, hd)
    b_fold = params["b_pf"][None, :] @ w_f                          # (1, hd)
    # Pre-project the embedding table so the gather yields its hidden contribution.
    deg_contrib = jnp.take(params["deg_table"] @ w_d, degrees, axis=0)  # (N, hd)
    x_in = jnp.concatenate([logits, features], axis=1)              # (N, c+fdim)

    # Block-diagonal [A_l | A_r]: all heads' el/er dots in one matmul.
    a_lr = jnp.zeros((hd, 2 * num_heads), jnp.float32)
    for h in range(num_heads):
        a_lr = a_lr.at[h * d:(h + 1) * d, h].set(params["attn_l"][h])
        a_lr = a_lr.at[h * d:(h + 1) * d, num_heads + h].set(params["attn_r"][h])
    # GATConv bias folded through the final projection.
    b_out = params["b_gat"][None, :] @ params["w_fin"] + params["b_fin"][None, :]

    # --- kernel 1: folded projection + attention dots --------------------------
    tile1 = _pick_row_tile(n)
    grid1 = n // tile1
    cin = x_in.shape[1]
    row1 = lambda i: (i, 0)
    full1 = lambda i: (0, 0)
    feat, elr = pl.pallas_call(
        feat_attn_kernel,
        out_shape=(jax.ShapeDtypeStruct((n, hd), bf16),
                   jax.ShapeDtypeStruct((n, 2 * num_heads), jnp.float32)),
        grid_spec=pltpu.PrefetchScalarGridSpec(
            num_scalar_prefetch=0, grid=(grid1,),
            in_specs=[pl.BlockSpec((tile1, cin), row1),
                      pl.BlockSpec((tile1, hd), row1),
                      pl.BlockSpec((cin, hd), full1),
                      pl.BlockSpec((hd, 2 * num_heads), full1),
                      pl.BlockSpec((1, hd), full1)],
            out_specs=[pl.BlockSpec((tile1, hd), row1),
                       pl.BlockSpec((tile1, 2 * num_heads), row1)]),
        compiler_params=pltpu.CompilerParams(
            dimension_semantics=("parallel",), vmem_limit_bytes=vmem_limit),
    )(x_in.astype(bf16), deg_contrib.astype(bf16), w_in.astype(bf16),
      a_lr.astype(bf16), b_fold.astype(bf16))

    # Layout plumbing between the kernels (one-time XLA ops, not the hot loop):
    #   * src attention terms lane-major (H, N) for row broadcasting,
    #   * per-head [feat_h | 1] slabs so p @ slab yields [agg | rowsum].
    el_t = elr[:, :num_heads].T                                       # (H, N)
    er = elr[:, num_heads:]                                           # (N, H)
    feat3 = jnp.concatenate(
        [feat.reshape(n, num_heads, d).transpose(1, 0, 2),
         jnp.ones((num_heads, n, 1), bf16)], axis=-1)                 # (H, N, D+1)

    adj_i8 = adj.astype(jnp.int8)          # adj never feeds the MXU: 1 byte/edge
    w_fin_bf = params["w_fin"].astype(bf16)

    # --- kernel 2: masked online-softmax + aggregation + final projection ------
    tile_src = _pick_src_tile(n)
    tile_dst = _pick_dst_tile(n, tile_src, num_heads, d1, hd, num_classes,
                              elem_bytes, budget)
    grid_dst, grid_src = n // tile_dst, n // tile_src
    kernel2 = functools.partial(gat_agg_kernel, num_heads=num_heads, head_dim=d,
                                negative_slope=0.2, elem_dtype=elem_dtype)

    def call_agg(single_buffer_consts):
        const_kw = {}
        if single_buffer_consts and hasattr(pl, "Buffered"):
            # Grid-invariant inputs: double-buffering them is pure VMEM waste.
            const_kw = dict(pipeline_mode=pl.Buffered(1))
        in_specs = [
            pl.BlockSpec((tile_dst, tile_src), lambda i, j: (i, j)),           # adj i8
            pl.BlockSpec((num_heads, tile_src), lambda i, j: (0, j)),          # el^T
            pl.BlockSpec((tile_dst, num_heads), lambda i, j: (i, 0)),          # er
            pl.BlockSpec((num_heads, tile_src, d1), lambda i, j: (0, j, 0)),   # [f|1]
            pl.BlockSpec((hd, num_classes), lambda i, j: (0, 0), **const_kw),  # w_fin
            pl.BlockSpec((1, num_classes), lambda i, j: (0, 0), **const_kw),   # b_out
        ]
        return pl.pallas_call(
            kernel2,
            out_shape=jax.ShapeDtypeStruct((n, num_classes), jnp.float32),
            grid_spec=pltpu.PrefetchScalarGridSpec(
                num_scalar_prefetch=0, grid=(grid_dst, grid_src),
                in_specs=in_specs,
                out_specs=pl.BlockSpec((tile_dst, num_classes),
                                       lambda i, j: (i, 0)),
                scratch_shapes=[
                    pltpu.VMEM((num_heads, tile_dst, 1), jnp.float32),   # running max
                    pltpu.VMEM((num_heads, tile_dst, d1), jnp.float32),  # [agg | l]
                ]),
            compiler_params=pltpu.CompilerParams(
                dimension_semantics=("parallel", "arbitrary"),
                vmem_limit_bytes=vmem_limit),
        )(adj_i8, el_t, er, feat3, w_fin_bf, b_out)

    try:
        return call_agg(True)
    except Exception:
        # Fall back to default double-buffering if Buffered(1) is unsupported.
        return call_agg(False)


# ----------------------------------------------------------------------------
# Pure-JAX f32 reference (mirrors DGL GATConv semantics) for correctness.
# ----------------------------------------------------------------------------
def reference_forward(params, adj, logits, features, degrees, *, num_heads):
    n = logits.shape[0]
    hidden = params["w_fc"].shape[1]
    d = hidden // num_heads
    feat_proj = features @ params["w_pf"] + params["b_pf"]
    deg_emb = params["deg_table"][degrees]
    x = jnp.concatenate([logits, feat_proj, deg_emb], axis=-1)
    feat = (x @ params["w_fc"]).reshape(n, num_heads, d)
    el = (feat * params["attn_l"][None]).sum(-1)           # (N, H)
    er = (feat * params["attn_r"][None]).sum(-1)           # (N, H)
    e = el[None, :, :] + er[:, None, :]                    # (dst, src, H)
    e = jnp.where(e >= 0, e, 0.2 * e)
    m = (adj > 0)[:, :, None]
    e = jnp.where(m, e, -jnp.inf)
    alpha = jax.nn.softmax(e, axis=1)
    alpha = jnp.where(m, alpha, 0.0)
    rst = jnp.einsum("ijh,jhd->ihd", alpha, feat)
    rst = rst + params["b_gat"].reshape(1, num_heads, d)
    return rst.reshape(n, -1) @ params["w_fin"] + params["b_fin"]


if __name__ == "__main__":
    # Small deterministic configuration (num_layers=2 -> one GATConv).
    N = 256
    NUM_CLASSES = 4
    FEATURE_DIM = 8
    FEATURE_HIDDEN = 8
    DEGREE_HIDDEN = 8
    HIDDEN_DIM = 32
    NUM_HEADS = 2

    key = jax.random.PRNGKey(0)
    ks = jax.random.split(key, 12)

    # deterministic random graph + self-loops (guarantees in-degree >= 1)
    adj = (jax.random.uniform(ks[0], (N, N)) < 0.1).astype(jnp.float32)
    adj = jnp.maximum(adj, jnp.eye(N, dtype=jnp.float32))
    in_deg = adj.sum(axis=1).astype(jnp.int32)     # incoming edges per dst
    out_deg = adj.sum(axis=0).astype(jnp.int32)    # outgoing edges per src
    degrees = in_deg + out_deg                     # g.in_degrees() + g.out_degrees()
    max_degree = int(jax.device_get(degrees.max())) + 1

    logits = jax.random.normal(ks[1], (N, NUM_CLASSES), jnp.float32)
    features = jax.random.normal(ks[2], (N, FEATURE_DIM), jnp.float32)

    head_dim = HIDDEN_DIM // NUM_HEADS
    in_channels = NUM_CLASSES + FEATURE_HIDDEN + DEGREE_HIDDEN

    params = {
        # proj_feature: nn.Linear(feature_dim, feature_hidden_dim)
        "w_pf": 0.1 * jax.random.normal(ks[3], (FEATURE_DIM, FEATURE_HIDDEN), jnp.float32),
        "b_pf": 0.1 * jax.random.normal(ks[4], (FEATURE_HIDDEN,), jnp.float32),
        # degree_embdder: nn.Embedding(max_degree, degree_hidden_dim)
        "deg_table": 0.1 * jax.random.normal(ks[5], (max_degree, DEGREE_HIDDEN), jnp.float32),
        # GATConv fc (bias=False), attn_l/attn_r (H, D), conv bias
        "w_fc": 0.1 * jax.random.normal(ks[6], (in_channels, HIDDEN_DIM), jnp.float32),
        "attn_l": 0.1 * jax.random.normal(ks[7], (NUM_HEADS, head_dim), jnp.float32),
        "attn_r": 0.1 * jax.random.normal(ks[8], (NUM_HEADS, head_dim), jnp.float32),
        "b_gat": 0.1 * jax.random.normal(ks[9], (HIDDEN_DIM,), jnp.float32),
        # final_proj: nn.Linear(hidden_dim, num_classes)
        "w_fin": 0.1 * jax.random.normal(ks[10], (HIDDEN_DIM, NUM_CLASSES), jnp.float32),
        "b_fin": 0.1 * jax.random.normal(ks[11], (NUM_CLASSES,), jnp.float32),
    }

    out = gat_gets_forward(params, adj, logits, features, degrees,
                           num_heads=NUM_HEADS)
    out = jax.block_until_ready(out)

    ref = reference_forward(params, adj, logits, features, degrees,
                            num_heads=NUM_HEADS)
    # bf16 MXU operands, bf16 elementwise softmax on v6e/v7x, and approx
    # reciprocal -> slightly relaxed tolerance (acknowledged error budget).
    np.testing.assert_allclose(np.asarray(out), np.asarray(ref),
                               rtol=2e-2, atol=2e-2)

    print("KERNEL_OK")
</pallas_src>

<mosaic_0001>
module attributes {stable_mosaic.version = 11 : i64} {
  func.func @feat_attn_kernel(%arg0: i32, %arg1: memref<128x12xbf16, #tpu.memory_space<vmem>>, %arg2: memref<128x32xbf16, #tpu.memory_space<vmem>>, %arg3: memref<12x32xbf16, #tpu.memory_space<vmem>>, %arg4: memref<32x4xbf16, #tpu.memory_space<vmem>>, %arg5: memref<1x32xbf16, #tpu.memory_space<vmem>>, %arg6: memref<128x32xbf16, #tpu.memory_space<vmem>>, %arg7: memref<128x4xf32, #tpu.memory_space<vmem>>) attributes {dimension_semantics = [#tpu.dimension_semantics<parallel>], iteration_bounds = array<i64: 2>, scalar_prefetch = 0 : i64, scratch_operands = 0 : i64, tpu.core_type = #tpu.core_type<tc>, window_params = [{transform_indices = @transform_0, window_bounds = array<i64: 128, 12>}, {transform_indices = @transform_1, window_bounds = array<i64: 128, 32>}, {pipeline_mode = #tpu.pipeline_mode<synchronous>, transform_indices = @transform_2, window_bounds = array<i64: 12, 32>}, {pipeline_mode = #tpu.pipeline_mode<synchronous>, transform_indices = @transform_3, window_bounds = array<i64: 32, 4>}, {pipeline_mode = #tpu.pipeline_mode<synchronous>, transform_indices = @transform_4, window_bounds = array<i64: 1, 32>}, {transform_indices = @transform_5, window_bounds = array<i64: 128, 32>}, {transform_indices = @transform_6, window_bounds = array<i64: 128, 4>}]} {
    %c0 = arith.constant 0 : index
    %c0_0 = arith.constant 0 : index
    %0 = vector.load %arg1[%c0, %c0_0] : memref<128x12xbf16, #tpu.memory_space<vmem>>, vector<128x12xbf16>
    %c0_1 = arith.constant 0 : index
    %c0_2 = arith.constant 0 : index
    %1 = vector.load %arg3[%c0_1, %c0_2] : memref<12x32xbf16, #tpu.memory_space<vmem>>, vector<12x32xbf16>
    %cst = arith.constant dense<0.000000e+00> : vector<128x32xf32>
    %2 = tpu.matmul %0, %1, %cst {dimension_numbers = #tpu.dot_dimension_numbers<[1], [0], [0], [1], [0, 0, 1, 1], [], []>} : vector<128x12xbf16>, vector<12x32xbf16>, vector<128x32xf32> -> vector<128x32xf32>
    %c0_3 = arith.constant 0 : index
    %c0_4 = arith.constant 0 : index
    %3 = vector.load %arg2[%c0_3, %c0_4] : memref<128x32xbf16, #tpu.memory_space<vmem>>, vector<128x32xbf16>
    %4 = arith.extf %3 : vector<128x32xbf16> to vector<128x32xf32>
    %5 = arith.addf %2, %4 : vector<128x32xf32>
    %c0_5 = arith.constant 0 : index
    %c0_6 = arith.constant 0 : index
    %6 = vector.load %arg5[%c0_5, %c0_6] : memref<1x32xbf16, #tpu.memory_space<vmem>>, vector<1x32xbf16>
    %7 = arith.extf %6 : vector<1x32xbf16> to vector<1x32xf32>
    %8 = vector.broadcast %7 : vector<1x32xf32> to vector<128x32xf32>
    %9 = arith.addf %5, %8 : vector<128x32xf32>
    %10 = arith.truncf %9 : vector<128x32xf32> to vector<128x32xbf16>
    %c0_7 = arith.constant 0 : index
    %c0_8 = arith.constant 0 : index
    %11 = vector.load %arg6[%c0_7, %c0_8] : memref<128x32xbf16, #tpu.memory_space<vmem>>, vector<128x32xbf16>
    tpu.vector_store %arg6[%c0_7, %c0_8], %10 {strides = array<i32>} : memref<128x32xbf16, #tpu.memory_space<vmem>>, vector<128x32xbf16>,
    %c0_9 = arith.constant 0 : index
    %c0_10 = arith.constant 0 : index
    %12 = vector.load %arg4[%c0_9, %c0_10] : memref<32x4xbf16, #tpu.memory_space<vmem>>, vector<32x4xbf16>
    %cst_11 = arith.constant dense<0.000000e+00> : vector<128x4xf32>
    %13 = tpu.matmul %10, %12, %cst_11 {dimension_numbers = #tpu.dot_dimension_numbers<[1], [0], [0], [1], [0, 0, 1, 1], [], []>} : vector<128x32xbf16>, vector<32x4xbf16>, vector<128x4xf32> -> vector<128x4xf32>
    %c0_12 = arith.constant 0 : index
    %c0_13 = arith.constant 0 : index
    %14 = vector.load %arg7[%c0_12, %c0_13] : memref<128x4xf32, #tpu.memory_space<vmem>>, vector<128x4xf32>
    tpu.vector_store %arg7[%c0_12, %c0_13], %13 {strides = array<i32>} : memref<128x4xf32, #tpu.memory_space<vmem>>, vector<128x4xf32>,
    return
  }
  func.func @transform_0(%arg0: i32) -> (i32, i32) {
    %c0_i32 = arith.constant 0 : i32
    %c0_i32_0 = arith.constant 0 : i32
    return %arg0, %c0_i32 : i32, i32
  }
  func.func @transform_1(%arg0: i32) -> (i32, i32) {
    %c0_i32 = arith.constant 0 : i32
    %c0_i32_0 = arith.constant 0 : i32
    return %arg0, %c0_i32 : i32, i32
  }
  func.func @transform_2(%arg0: i32) -> (i32, i32) {
    %c0_i32 = arith.constant 0 : i32
    %c0_i32_0 = arith.constant 0 : i32
    %c0_i32_1 = arith.constant 0 : i32
    return %c0_i32, %c0_i32_0 : i32, i32
  }
  func.func @transform_3(%arg0: i32) -> (i32, i32) {
    %c0_i32 = arith.constant 0 : i32
    %c0_i32_0 = arith.constant 0 : i32
    %c0_i32_1 = arith.constant 0 : i32
    return %c0_i32, %c0_i32_0 : i32, i32
  }
  func.func @transform_4(%arg0: i32) -> (i32, i32) {
    %c0_i32 = arith.constant 0 : i32
    %c0_i32_0 = arith.constant 0 : i32
    %c0_i32_1 = arith.constant 0 : i32
    return %c0_i32, %c0_i32_0 : i32, i32
  }
  func.func @transform_5(%arg0: i32) -> (i32, i32) {
    %c0_i32 = arith.constant 0 : i32
    %c0_i32_0 = arith.constant 0 : i32
    return %arg0, %c0_i32 : i32, i32
  }
  func.func @transform_6(%arg0: i32) -> (i32, i32) {
    %c0_i32 = arith.constant 0 : i32
    %c0_i32_0 = arith.constant 0 : i32
    return %arg0, %c0_i32 : i32, i32
  }
}

</mosaic_0001>

<llo_original>
// kernel: tpu_custom_call.1
$region0: #{tpu_custom_call.1}
  #allocation0 [shape = 'u32[]', space=smem, size = 0x4, offset = 0x4, fixed_abs, tag = 'smem constant byte address 0x4 - core index']
  #allocation1 [shape = 'u32[144,128]{1,0:T(1,128)}', space=vmem, size = 0x12000, scoped, tag = 'internal scratch']
  %s0 = inlined_call_operand.vmem [shape: bf16[256,12], index: 0, kind: input, shape index: {}]
  %s1 = inlined_call_operand.vmem [shape: bf16[256,32], index: 1, kind: input, shape index: {}]
  %s2 = inlined_call_operand.vmem [shape: bf16[12,32], index: 2, kind: input, shape index: {}]
  %s3 = inlined_call_operand.vmem [shape: bf16[32,4], index: 3, kind: input, shape index: {}]
  %s4 = inlined_call_operand.vmem [shape: bf16[1,32], index: 4, kind: input, shape index: {}]
  %s5 = inlined_call_operand.vmem [shape: bf16[256,32], index: 5, kind: output, shape index: {0}]
  %s6 = inlined_call_operand.vmem [shape: f32[256,4], index: 6, kind: output, shape index: {1}]
  %7 = xla_tuple %s5, %s6
  %s8 = sld [smem:[#allocation0]]
  $region61: #{tpu_custom_call.1} parent=0
    _
  %s10 = ssub.s32 1, %s8
  %s11 = scalar_select 0, %s10, %s8
  loop: start=0, step=1, limit=4
  $region2: #{tpu_custom_call.1} parent=0 // loop_pre_header
    _
  $region3: #{tpu_custom_call.1} parent=0 // loop_header
    %s13 = sphi 0, %s17
    %p14 = scmp.ge.s32.totalorder %s13, 4
    %s23 = sphi 0, %s25
    %s26 = sphi 0, %s23
    %s27 = sphi 0, %s26
    %s43 = sphi 0, %s27
    %s49 = sphi 0, %s51
    %s52 = sphi 0, %s49
    %s53 = sphi 0, %s52
    %s69 = sphi 0, %s53
    %s73 = sphi 0, %s73
    %s75 = sphi 0, %s73
    %s76 = sphi 0, %s75
    %s90 = sphi 0, %s76
    %s94 = sphi 0, %s94
    %s96 = sphi 0, %s94
    %s97 = sphi 0, %s96
    %s111 = sphi 0, %s97
    %s115 = sphi 0, %s115
    %s117 = sphi 0, %s115
    %s118 = sphi 0, %s117
    %s132 = sphi 0, %s118
    %s138 = sphi 0, %s140
    %s141 = sphi 0, %s138
    %s142 = sphi 0, %s141
    %s158 = sphi 0, %s142
    %s164 = sphi 0, %s166
    %s167 = sphi 0, %s164
    %s168 = sphi 0, %s167
    %s184 = sphi 0, %s168
  $region4: #{tpu_custom_call.1} parent=0 // loop_header_branch
    %16 = sbr.rel (%p14) target = $region8
  $region5: #{tpu_custom_call.1} parent=0 // loop_body
    %s18 = ssub.s32 %s13, 1
    %s19 = ssub.s32 %s13, 2
    %s20 = sadd.s32 %s13, 1
    %s21 = ssub.s32 %s13, %s20
    %p22 = scmp.eq.s32.totalorder %s21, 0
    %s24 = sadd.s32 %s23, 1
    %s25 = scalar_select %p22, %s23, %s24
    %p28 = pneg %p22
    %p29 = scmp.eq.s32.totalorder %s13, 1
    %p30 = por %p28, %p29
    %p31 = scmp.ne.s32.totalorder %s23, %s26
    %p32 = scmp.eq.s32.totalorder %s13, 0
    %p33 = por %p31, %p32
    %p34 = scmp.ne.s32.totalorder %s23, %s26
    %p35 = scmp.eq.s32.totalorder %s18, 1
    %p36 = por %p34, %p35
    %p37 = scmp.ne.s32.totalorder %s26, %s27
    %p38 = scmp.eq.s32.totalorder %s18, 0
    %p39 = por %p37, %p38
    %p40 = scmp.ne.s32.totalorder %s26, %s27
    %p41 = scmp.eq.s32.totalorder %s19, 1
    %p42 = por %p40, %p41
    %p44 = scmp.ne.s32.totalorder %s27, %s43
    %p45 = scmp.eq.s32.totalorder %s19, 0
    %p46 = por %p44, %p45
    %s47 = ssub.s32 %s13, %s20
    %p48 = scmp.eq.s32.totalorder %s47, 0
    %s50 = sadd.s32 %s49, 1
    %s51 = scalar_select %p48, %s49, %s50
    %p54 = pneg %p48
    %p55 = scmp.eq.s32.totalorder %s13, 1
    %p56 = por %p54, %p55
    %p57 = scmp.ne.s32.totalorder %s49, %s52
    %p58 = scmp.eq.s32.totalorder %s13, 0
    %p59 = por %p57, %p58
    %p60 = scmp.ne.s32.totalorder %s49, %s52
    %p61 = scmp.eq.s32.totalorder %s18, 1
    %p62 = por %p60, %p61
    %p63 = scmp.ne.s32.totalorder %s52, %s53
    %p64 = scmp.eq.s32.totalorder %s18, 0
    %p65 = por %p63, %p64
    %p66 = scmp.ne.s32.totalorder %s52, %s53
    %p67 = scmp.eq.s32.totalorder %s19, 1
    %p68 = por %p66, %p67
    %p70 = scmp.ne.s32.totalorder %s53, %s69
    %p71 = scmp.eq.s32.totalorder %s19, 0
    %p72 = por %p70, %p71
    %s74 = sadd.s32 %s73, 1
    %p77 = scmp.eq.s32.totalorder %s13, 1
    %p78 = scmp.ne.s32.totalorder %s73, %s75
    %p79 = scmp.eq.s32.totalorder %s13, 0
    %p80 = por %p78, %p79
    %p81 = scmp.ne.s32.totalorder %s73, %s75
    %p82 = scmp.eq.s32.totalorder %s18, 1
    %p83 = por %p81, %p82
    %p84 = scmp.ne.s32.totalorder %s75, %s76
    %p85 = scmp.eq.s32.totalorder %s18, 0
    %p86 = por %p84, %p85
    %p87 = scmp.ne.s32.totalorder %s75, %s76
    %p88 = scmp.eq.s32.totalorder %s19, 1
    %p89 = por %p87, %p88
    %p91 = scmp.ne.s32.totalorder %s76, %s90
    %p92 = scmp.eq.s32.totalorder %s19, 0
    %p93 = por %p91, %p92
    %s95 = sadd.s32 %s94, 1
    %p98 = scmp.eq.s32.totalorder %s13, 1
    %p99 = scmp.ne.s32.totalorder %s94, %s96
    %p100 = scmp.eq.s32.totalorder %s13, 0
    %p101 = por %p99, %p100
    %p102 = scmp.ne.s32.totalorder %s94, %s96
    %p103 = scmp.eq.s32.totalorder %s18, 1
    %p104 = por %p102, %p103
    %p105 = scmp.ne.s32.totalorder %s96, %s97
    %p106 = scmp.eq.s32.totalorder %s18, 0
    %p107 = por %p105, %p106
    %p108 = scmp.ne.s32.totalorder %s96, %s97
    %p109 = scmp.eq.s32.totalorder %s19, 1
    %p110 = por %p108, %p109
    %p112 = scmp.ne.s32.totalorder %s97, %s111
    %p113 = scmp.eq.s32.totalorder %s19, 0
    %p114 = por %p112, %p113
    %s116 = sadd.s32 %s115, 1
    %p119 = scmp.eq.s32.totalorder %s13, 1
    %p120 = scmp.ne.s32.totalorder %s115, %s117
    %p121 = scmp.eq.s32.totalorder %s13, 0
    %p122 = por %p120, %p121
    %p123 = scmp.ne.s32.totalorder %s115, %s117
    %p124 = scmp.eq.s32.totalorder %s18, 1
    %p125 = por %p123, %p124
    %p126 = scmp.ne.s32.totalorder %s117, %s118
    %p127 = scmp.eq.s32.totalorder %s18, 0
    %p128 = por %p126, %p127
    %p129 = scmp.ne.s32.totalorder %s117, %s118
    %p130 = scmp.eq.s32.totalorder %s19, 1
    %p131 = por %p129, %p130
    %p133 = scmp.ne.s32.totalorder %s118, %s132
    %p134 = scmp.eq.s32.totalorder %s19, 0
    %p135 = por %p133, %p134
    %s136 = ssub.s32 %s13, %s20
    %p137 = scmp.eq.s32.totalorder %s136, 0
    %s139 = sadd.s32 %s138, 1
    %s140 = scalar_select %p137, %s138, %s139
    %p143 = pneg %p137
    %p144 = scmp.eq.s32.totalorder %s13, 1
    %p145 = por %p143, %p144
    %p146 = scmp.ne.s32.totalorder %s138, %s141
    %p147 = scmp.eq.s32.totalorder %s13, 0
    %p148 = por %p146, %p147
    %p149 = scmp.ne.s32.totalorder %s138, %s141
    %p150 = scmp.eq.s32.totalorder %s18, 1
    %p151 = por %p149, %p150
    %p152 = scmp.ne.s32.totalorder %s141, %s142
    %p153 = scmp.eq.s32.totalorder %s18, 0
    %p154 = por %p152, %p153
    %p155 = scmp.ne.s32.totalorder %s141, %s142
    %p156 = scmp.eq.s32.totalorder %s19, 1
    %p157 = por %p155, %p156
    %p159 = scmp.ne.s32.totalorder %s142, %s158
    %p160 = scmp.eq.s32.totalorder %s19, 0
    %p161 = por %p159, %p160
    %s162 = ssub.s32 %s13, %s20
    %p163 = scmp.eq.s32.totalorder %s162, 0
    %s165 = sadd.s32 %s164, 1
    %s166 = scalar_select %p163, %s164, %s165
    %p169 = pneg %p163
    %p170 = scmp.eq.s32.totalorder %s13, 1
    %p171 = por %p169, %p170
    %p172 = scmp.ne.s32.totalorder %s164, %s167
    %p173 = scmp.eq.s32.totalorder %s13, 0
    %p174 = por %p172, %p173
    %p175 = scmp.ne.s32.totalorder %s164, %s167
    %p176 = scmp.eq.s32.totalorder %s18, 1
    %p177 = por %p175, %p176
    %p178 = scmp.ne.s32.totalorder %s167, %s168
    %p179 = scmp.eq.s32.totalorder %s18, 0
    %p180 = por %p178, %p179
    %p181 = scmp.ne.s32.totalorder %s167, %s168
    %p182 = scmp.eq.s32.totalorder %s19, 1
    %p183 = por %p181, %p182
    %p185 = scmp.ne.s32.totalorder %s168, %s184
    %p186 = scmp.eq.s32.totalorder %s19, 0
    %p187 = por %p185, %p186
    %p188 = scmp.le.s32.totalorder 1, %s13
    %p189 = scmp.lt.s32.totalorder %s13, 3
    %p190 = pnand %p188, %p189
    %p191 = pneg %p190
    // Predicated region
    $region9: #{tpu_custom_call.1} parent=5 // pred_check
      _
    $region10: #{tpu_custom_call.1} parent=5 // pred_check_branch
      %193 = sbr.rel (%p190) target = $region12
    $region11: #{tpu_custom_call.1} parent=5 // pred_region
      %s194 = ssub.s32 %s13, 1
      // Predicated region
      $region13: #{tpu_custom_call.1} parent=11 // pred_check
        %p195 = pneg %p86
      $region14: #{tpu_custom_call.1} parent=11 // pred_check_branch
        %197 = sbr.rel (%p195) target = $region16
      $region15: #{tpu_custom_call.1} parent=11 // pred_region
        _
      $region16: #{tpu_custom_call.1} parent=11 // pred_fallthru
        _
      // Predicated region
      $region17: #{tpu_custom_call.1} parent=11 // pred_check
        %p198 = pneg %p107
      $region18: #{tpu_custom_call.1} parent=11 // pred_check_branch
        %200 = sbr.rel (%p198) target = $region20
      $region19: #{tpu_custom_call.1} parent=11 // pred_region
        _
      $region20: #{tpu_custom_call.1} parent=11 // pred_fallthru
        _
      // Predicated region
      $region21: #{tpu_custom_call.1} parent=11 // pred_check
        %p201 = pneg %p128
      $region22: #{tpu_custom_call.1} parent=11 // pred_check_branch
        %203 = sbr.rel (%p201) target = $region24
      $region23: #{tpu_custom_call.1} parent=11 // pred_region
        _
      $region24: #{tpu_custom_call.1} parent=11 // pred_fallthru
        _
    $region12: #{tpu_custom_call.1} parent=5 // pred_fallthru
      _
    %p204 = scmp.lt.s32.totalorder %s13, 2
    // Predicated region
    $region25: #{tpu_custom_call.1} parent=5 // pred_check
      %p205 = pneg %p204
    $region26: #{tpu_custom_call.1} parent=5 // pred_check_branch
      %207 = sbr.rel (%p205) target = $region28
    $region27: #{tpu_custom_call.1} parent=5 // pred_region
      // Predicated region
      $region29: #{tpu_custom_call.1} parent=27 // pred_check
        %p208 = pneg %p33
      $region30: #{tpu_custom_call.1} parent=27 // pred_check_branch
        %210 = sbr.rel (%p208) target = $region32
      $region31: #{tpu_custom_call.1} parent=27 // pred_region
        %s211 = smul.u32 16, %s13
        %p212 = scmp.lt.s32.totalorder %s211, 31
        %s213 = scalar_select %p212, %s211, 31
        %s214 = smul.addr %s213, 4
        %s215 = scalar_lea.vmem %s0, %s214
        %s216 = smul.u32 16, %s13
      $region32: #{tpu_custom_call.1} parent=27 // pred_fallthru
        _
      // Predicated region
      $region33: #{tpu_custom_call.1} parent=27 // pred_check
        %p217 = pneg %p59
      $region34: #{tpu_custom_call.1} parent=27 // pred_check_branch
        %219 = sbr.rel (%p217) target = $region36
      $region35: #{tpu_custom_call.1} parent=27 // pred_region
        %s220 = smul.u32 16, %s13
        %p221 = scmp.lt.s32.totalorder %s220, 31
        %s222 = scalar_select %p221, %s220, 31
        %s223 = smul.addr %s222, 4
        %s224 = scalar_lea.vmem %s1, %s223
        %s225 = smul.u32 16, %s13
      $region36: #{tpu_custom_call.1} parent=27 // pred_fallthru
        _
    $region28: #{tpu_custom_call.1} parent=5 // pred_fallthru
      _
    %p226 = scmp.le.s32.totalorder 1, %s13
    %p227 = scmp.lt.s32.totalorder %s13, 3
    %p228 = pnand %p226, %p227
    %p229 = pneg %p228
    // Predicated region
    $region37: #{tpu_custom_call.1} parent=5 // pred_check
      _
    $region38: #{tpu_custom_call.1} parent=5 // pred_check_branch
      %231 = sbr.rel (%p228) target = $region40
    $region39: #{tpu_custom_call.1} parent=5 // pred_region
      %s232 = ssub.s32 %s13, 1
      %s233 = smul.u32 16, %s18
      %p234 = scmp.lt.s32.totalorder %s233, 31
      %s235 = scalar_select %p234, %s233, 31
      %s236 = smul.addr %s235, 4
      %s237 = scalar_lea.vmem %s0, %s236
      %p238 = pneg %p39
      %p239 = pneg %p36
      %s240 = smul.u32 16, %s18
      %p241 = scmp.lt.s32.totalorder %s240, 31
      %s242 = scalar_select %p241, %s240, 31
      %s243 = smul.addr %s242, 4
      %s244 = scalar_lea.vmem %s1, %s243
      %p245 = pneg %p65
      %p246 = pneg %p62
      %p247 = pneg %p86
      %p248 = pneg %p83
      %p249 = pneg %p107
      %p250 = pneg %p104
      %p251 = pneg %p128
      %p252 = pneg %p125
      %p253 = pneg %p154
      %p254 = pneg %p151
      %s255 = smul.u32 16, %s18
      %p256 = scmp.lt.s32.totalorder %s255, 31
      %s257 = scalar_select %p256, %s255, 31
      %s258 = smul.addr %s257, 4
      %s259 = scalar_lea.vmem %s5, %s258
      %p260 = pneg %p180
      %p261 = pneg %p177
      %s262 = smul.u32 16, %s18
      %p263 = scmp.lt.s32.totalorder %s262, 31
      %s264 = scalar_select %p263, %s262, 31
      %s265 = smul.addr %s264, 8
      %s266 = scalar_lea.vmem %s6, %s265
      %s267 = smul.u32 16, %s18
      %p268 = scmp.lt.s32.totalorder %s267, 31
      %s269 = scalar_select %p268, %s267, 31
      %s270 = smul.addr %s269, 4
      %s271 = scalar_lea.vmem %s0, %s270
      %s272 = smul.u32 16, %s18
      %s273 = smul.u32 16, %s18
      %p274 = scmp.lt.s32.totalorder %s273, 31
      %s275 = scalar_select %p274, %s273, 31
      %s276 = smul.addr %s275, 4
      %s277 = scalar_lea.vmem %s1, %s276
      %s278 = smul.u32 16, %s18
      %s279 = smul.u32 16, %s18
      %p280 = scmp.lt.s32.totalorder %s279, 31
      %s281 = scalar_select %p280, %s279, 31
      %s282 = smul.addr %s281, 4
      %s283 = scalar_lea.vmem %s5, %s282
      %s284 = smul.u32 16, %s18
      %s285 = smul.u32 16, %s18
      %p286 = scmp.lt.s32.totalorder %s285, 31
      %s287 = scalar_select %p286, %s285, 31
      %s288 = smul.addr %s287, 8
      %s289 = scalar_lea.vmem %s6, %s288
      %s290 = smul.u32 16, %s18
      %v292 = vld [vmem:[%s271] sm:$0xf]
      %v293 = vld [vmem:[%s271 + $0x4] sm:$0xf]
      %v294 = vld [vmem:[%s271 + $0x8] sm:$0xf]
      %v295 = vld [vmem:[%s271 + $0xc] sm:$0xf]
      %v296 = vld [vmem:[%s271 + $0x10] sm:$0xf]
      %v297 = vld [vmem:[%s271 + $0x14] sm:$0xf]
      %v298 = vld [vmem:[%s271 + $0x18] sm:$0xf]
      %v299 = vld [vmem:[%s271 + $0x1c] sm:$0xf]
      %v300 = vld [vmem:[%s271 + $0x20] sm:$0xf]
      %v301 = vld [vmem:[%s271 + $0x24] sm:$0xf]
      %v302 = vld [vmem:[%s271 + $0x28] sm:$0xf]
      %v303 = vld [vmem:[%s271 + $0x2c] sm:$0xf]
      %v304 = vld [vmem:[%s271 + $0x30] sm:$0xf]
      %v305 = vld [vmem:[%s271 + $0x34] sm:$0xf]
      %v306 = vld [vmem:[%s271 + $0x38] sm:$0xf]
      %v307 = vld [vmem:[%s271 + $0x3c] sm:$0xf]
      %v308 = vld [vmem:[%s2] sm:$0xf]
      %v309 = vld [vmem:[%s2 + $0x4] sm:$0x3]
      %v310 = vld [vmem:[%s277] sm:$0xf]
      %v311 = vld [vmem:[%s277 + $0x4] sm:$0xf]
      %v312 = vld [vmem:[%s277 + $0x8] sm:$0xf]
      %v313 = vld [vmem:[%s277 + $0xc] sm:$0xf]
      %v314 = vld [vmem:[%s277 + $0x10] sm:$0xf]
      %v315 = vld [vmem:[%s277 + $0x14] sm:$0xf]
      %v316 = vld [vmem:[%s277 + $0x18] sm:$0xf]
      %v317 = vld [vmem:[%s277 + $0x1c] sm:$0xf]
      %v318 = vld [vmem:[%s277 + $0x20] sm:$0xf]
      %v319 = vld [vmem:[%s277 + $0x24] sm:$0xf]
      %v320 = vld [vmem:[%s277 + $0x28] sm:$0xf]
      %v321 = vld [vmem:[%s277 + $0x2c] sm:$0xf]
      %v322 = vld [vmem:[%s277 + $0x30] sm:$0xf]
      %v323 = vld [vmem:[%s277 + $0x34] sm:$0xf]
      %v324 = vld [vmem:[%s277 + $0x38] sm:$0xf]
      %v325 = vld [vmem:[%s277 + $0x3c] sm:$0xf]
      %v326 = vunpack.c.l.bf16 %v310
      %v327 = vunpack.c.l.bf16 %v311
      %v328 = vunpack.c.l.bf16 %v312
      %v329 = vunpack.c.l.bf16 %v313
      %v330 = vunpack.c.l.bf16 %v314
      %v331 = vunpack.c.l.bf16 %v315
      %v332 = vunpack.c.l.bf16 %v316
      %v333 = vunpack.c.l.bf16 %v317
      %v334 = vunpack.c.l.bf16 %v318
      %v335 = vunpack.c.l.bf16 %v319
      %v336 = vunpack.c.l.bf16 %v320
      %v337 = vunpack.c.l.bf16 %v321
      %v338 = vunpack.c.l.bf16 %v322
      %v339 = vunpack.c.l.bf16 %v323
      %v340 = vunpack.c.l.bf16 %v324
      %v341 = vunpack.c.l.bf16 %v325
      %v358 = vunpack.c.l.b16 %v292
      %v359 = vunpack.c.l.b16 %v293
      %v360 = vunpack.c.l.b16 %v294
      %v361 = vunpack.c.l.b16 %v295
      %v362 = vunpack.c.l.b16 %v296
      %v363 = vunpack.c.l.b16 %v297
      %v364 = vunpack.c.l.b16 %v298
      %v365 = vunpack.c.l.b16 %v299
      %v366 = vunpack.c.l.b16 %v300
      %v367 = vunpack.c.l.b16 %v301
      %v368 = vunpack.c.l.b16 %v302
      %v369 = vunpack.c.l.b16 %v303
      %v370 = vunpack.c.l.b16 %v304
      %v371 = vunpack.c.l.b16 %v305
      %v372 = vunpack.c.l.b16 %v306
      %v373 = vunpack.c.l.b16 %v307
      %v374 = vpack.c.b16 %v359, %v358
      %v375 = vpack.c.b16 %v361, %v360
      %v376 = vpack.c.b16 %v363, %v362
      %v377 = vpack.c.b16 %v365, %v364
      %v378 = vpack.c.b16 %v367, %v366
      %v379 = vpack.c.b16 %v369, %v368
      %v380 = vpack.c.b16 %v371, %v370
      %v381 = vpack.c.b16 %v373, %v372
      %v384 = vunpack.c.l.b16 %v308
      %v385 = vunpack.c.l.b16 %v309
      %v386 = vpack.c.b16 %v385, %v384
      %vm387 = vcmask 97280
      %v389 = vsel %vm387, %v374, 0
      %v392 = vsel %vm387, %v375, 0
      %v395 = vsel %vm387, %v376, 0
      %v398 = vsel %vm387, %v377, 0
      %v401 = vsel %vm387, %v378, 0
      %v404 = vsel %vm387, %v379, 0
      %v407 = vsel %vm387, %v380, 0
      %v410 = vsel %vm387, %v381, 0
      %vm412 = vcmask 1045504
      %v414 = vsel %vm412, %v386, 0
      %416 = vmatprep.subr.bf16.mxu0 0
      %417 = vmatpush1.bf16.msra.mxu0 %v414
      %418 = vmatprep.subr.bf16.mxu0 0
      %419 = vmatpush1.bf16.msra.mxu0 0
      %420 = vmatprep.subr.bf16.mxu0 0
      %421 = vmatpush1.bf16.msra.mxu0 0
      %422 = vmatprep.subr.bf16.mxu0 0
      %423 = vmatpush1.bf16.msra.mxu0 0
      %424 = vmatprep.subr.bf16.mxu0 0
      %425 = vmatpush1.bf16.msra.mxu0 0
      %426 = vmatprep.subr.bf16.mxu0 0
      %427 = vmatpush1.bf16.msra.mxu0 0
      %428 = vmatprep.subr.bf16.mxu0 0
      %429 = vmatpush1.bf16.msra.mxu0 0
      %430 = vmatprep.subr.bf16.mxu0 0
      %431 = vmatpush1.bf16.msra.mxu0 0
      %432 = vmatprep.subr.bf16.mxu0 0
      %433 = vmatpush1.bf16.msra.mxu0 0
      %434 = vmatprep.subr.bf16.mxu0 0
      %435 = vmatpush1.bf16.msra.mxu0 0
      %436 = vmatprep.subr.bf16.mxu0 0
      %437 = vmatpush1.bf16.msra.mxu0 0
      %438 = vmatprep.subr.bf16.mxu0 0
      %439 = vmatpush1.bf16.msra.mxu0 0
      %440 = vmatprep.subr.bf16.mxu0 0
      %441 = vmatpush1.bf16.msra.mxu0 0
      %442 = vmatprep.subr.bf16.mxu0 0
      %443 = vmatpush1.bf16.msra.mxu0 0
      %444 = vmatprep.subr.bf16.mxu0 0
      %445 = vmatpush1.bf16.msra.mxu0 0
      %446 = vmatprep.subr.bf16.mxu0 0
      %447 = vmatpush1.bf16.msra.mxu0 0
      %448 = vmatprep.mubr.bf16.mxu0 0
      %449 = vmatmul.mubr.bf16.gmra.mrb[0].mxu0 %v389
      %v450 = vpop.f32.mrb[0].mxu0
      %v451 = vadd.f32 %v326, %v450
      %v452 = vpop.f32.mrb[0].mxu0
      %v453 = vpop.f32.mrb[0].mxu0
      %v454 = vadd.f32 %v327, %v453
      %v455 = vpop.f32.mrb[0].mxu0
      %456 = vmatprep.mubr.bf16.mxu0 0
      %457 = vmatmul.mubr.bf16.gmra.mrb[0].mxu0 %v392
      %v458 = vpop.f32.mrb[0].mxu0
      %v459 = vadd.f32 %v328, %v458
      %v460 = vpop.f32.mrb[0].mxu0
      %v461 = vpop.f32.mrb[0].mxu0
      %v462 = vadd.f32 %v329, %v461
      %v463 = vpop.f32.mrb[0].mxu0
      %464 = vmatprep.mubr.bf16.mxu0 0
      %465 = vmatmul.mubr.bf16.gmra.mrb[0].mxu0 %v395
      %v466 = vpop.f32.mrb[0].mxu0
      %v467 = vadd.f32 %v330, %v466
      %v468 = vpop.f32.mrb[0].mxu0
      %v469 = vpop.f32.mrb[0].mxu0
      %v470 = vadd.f32 %v331, %v469
      %v471 = vpop.f32.mrb[0].mxu0
      %472 = vmatprep.mubr.bf16.mxu0 0
      %473 = vmatmul.mubr.bf16.gmra.mrb[0].mxu0 %v398
      %v474 = vpop.f32.mrb[0].mxu0
      %v475 = vadd.f32 %v332, %v474
      %v476 = vpop.f32.mrb[0].mxu0
      %v477 = vpop.f32.mrb[0].mxu0
      %v478 = vadd.f32 %v333, %v477
      %v479 = vpop.f32.mrb[0].mxu0
      %480 = vmatprep.mubr.bf16.mxu0 0
      %481 = vmatmul.mubr.bf16.gmra.mrb[0].mxu0 %v401
      %v482 = vpop.f32.mrb[0].mxu0
      %v483 = vadd.f32 %v334, %v482
      %v484 = vpop.f32.mrb[0].mxu0
      %v485 = vpop.f32.mrb[0].mxu0
      %v486 = vadd.f32 %v335, %v485
      %v487 = vpop.f32.mrb[0].mxu0
      %488 = vmatprep.mubr.bf16.mxu0 0
      %489 = vmatmul.mubr.bf16.gmra.mrb[0].mxu0 %v404
      %v490 = vpop.f32.mrb[0].mxu0
      %v491 = vadd.f32 %v336, %v490
      %v492 = vpop.f32.mrb[0].mxu0
      %v493 = vpop.f32.mrb[0].mxu0
      %v494 = vadd.f32 %v337, %v493
      %v495 = vpop.f32.mrb[0].mxu0
      %496 = vmatprep.mubr.bf16.mxu0 0
      %497 = vmatmul.mubr.bf16.gmra.mrb[0].mxu0 %v407
      %v498 = vpop.f32.mrb[0].mxu0
      %v499 = vadd.f32 %v338, %v498
      %v500 = vpop.f32.mrb[0].mxu0
      %v501 = vpop.f32.mrb[0].mxu0
      %v502 = vadd.f32 %v339, %v501
      %v503 = vpop.f32.mrb[0].mxu0
      %504 = vmatprep.mubr.bf16.mxu0 0
      %505 = vmatmul.mubr.bf16.gmra.mrb[0].mxu0 %v410
      %v506 = vpop.f32.mrb[0].mxu0
      %v507 = vadd.f32 %v340, %v506
      %v508 = vpop.f32.mrb[0].mxu0
      %v509 = vpop.f32.mrb[0].mxu0
      %v510 = vadd.f32 %v341, %v509
      %v511 = vpop.f32.mrb[0].mxu0
      %512 = vdwg.mxu0
      %v513 = vld [vmem:[%s4] sm:$0x1]
      %v514 = vunpack.c.l.bf16 %v513
      %v515 = vlaneseq
      %v516 = vshrl.u32 %v515, 7
      %v517 = vsub.s32 0, %v516
      %v518 = vrot.slane %v514, %v517
      %v519 = vadd.f32 %v451, %v518
      %v520 = vadd.f32 %v454, %v518
      %v521 = vadd.f32 %v459, %v518
      %v522 = vadd.f32 %v462, %v518
      %v523 = vadd.f32 %v467, %v518
      %v524 = vadd.f32 %v470, %v518
      %v525 = vadd.f32 %v475, %v518
      %v526 = vadd.f32 %v478, %v518
      %v527 = vadd.f32 %v483, %v518
      %v528 = vadd.f32 %v486, %v518
      %v529 = vadd.f32 %v491, %v518
      %v530 = vadd.f32 %v494, %v518
      %v531 = vadd.f32 %v499, %v518
      %v532 = vadd.f32 %v502, %v518
      %v533 = vadd.f32 %v507, %v518
      %v534 = vadd.f32 %v510, %v518
      %v535 = vpack.c.bf16 %v520, %v519
      %v536 = vpack.c.bf16 %v522, %v521
      %v537 = vpack.c.bf16 %v524, %v523
      %v538 = vpack.c.bf16 %v526, %v525
      %v539 = vpack.c.bf16 %v528, %v527
      %v540 = vpack.c.bf16 %v530, %v529
      %v541 = vpack.c.bf16 %v532, %v531
      %v542 = vpack.c.bf16 %v534, %v533
      %v551 = vunpack.c.l.b16 %v535
      %v552 = vunpack.c.h.b16 %v535
      %v553 = vunpack.c.l.b16 %v536
      %v554 = vunpack.c.h.b16 %v536
      %v555 = vunpack.c.l.b16 %v537
      %v556 = vunpack.c.h.b16 %v537
      %v557 = vunpack.c.l.b16 %v538
      %v558 = vunpack.c.h.b16 %v538
      %v559 = vunpack.c.l.b16 %v539
      %v560 = vunpack.c.h.b16 %v539
      %v561 = vunpack.c.l.b16 %v540
      %v562 = vunpack.c.h.b16 %v540
      %v563 = vunpack.c.l.b16 %v541
      %v564 = vunpack.c.h.b16 %v541
      %v565 = vunpack.c.l.b16 %v542
      %v566 = vunpack.c.h.b16 %v542
      %v567 = vpack.c.b16 %v551, %v551
      %v568 = vpack.c.b16 %v552, %v552
      %v569 = vpack.c.b16 %v553, %v553
      %v570 = vpack.c.b16 %v554, %v554
      %v571 = vpack.c.b16 %v555, %v555
      %v572 = vpack.c.b16 %v556, %v556
      %v573 = vpack.c.b16 %v557, %v557
      %v574 = vpack.c.b16 %v558, %v558
      %v575 = vpack.c.b16 %v559, %v559
      %v576 = vpack.c.b16 %v560, %v560
      %v577 = vpack.c.b16 %v561, %v561
      %v578 = vpack.c.b16 %v562, %v562
      %v579 = vpack.c.b16 %v563, %v563
      %v580 = vpack.c.b16 %v564, %v564
      %v581 = vpack.c.b16 %v565, %v565
      %v582 = vpack.c.b16 %v566, %v566
      %vm599 = vcmask 257024
      %600 = vst.msk [vmem:[%s283] sm:$0xf] %vm599, %v567
      %601 = vst.msk [vmem:[%s283 + $0x4] sm:$0xf] %vm599, %v568
      %602 = vst.msk [vmem:[%s283 + $0x8] sm:$0xf] %vm599, %v569
      %603 = vst.msk [vmem:[%s283 + $0xc] sm:$0xf] %vm599, %v570
      %604 = vst.msk [vmem:[%s283 + $0x10] sm:$0xf] %vm599, %v571
      %605 = vst.msk [vmem:[%s283 + $0x14] sm:$0xf] %vm599, %v572
      %606 = vst.msk [vmem:[%s283 + $0x18] sm:$0xf] %vm599, %v573
      %607 = vst.msk [vmem:[%s283 + $0x1c] sm:$0xf] %vm599, %v574
      %608 = vst.msk [vmem:[%s283 + $0x20] sm:$0xf] %vm599, %v575
      %609 = vst.msk [vmem:[%s283 + $0x24] sm:$0xf] %vm599, %v576
      %610 = vst.msk [vmem:[%s283 + $0x28] sm:$0xf] %vm599, %v577
      %611 = vst.msk [vmem:[%s283 + $0x2c] sm:$0xf] %vm599, %v578
      %612 = vst.msk [vmem:[%s283 + $0x30] sm:$0xf] %vm599, %v579
      %613 = vst.msk [vmem:[%s283 + $0x34] sm:$0xf] %vm599, %v580
      %614 = vst.msk [vmem:[%s283 + $0x38] sm:$0xf] %vm599, %v581
      %615 = vst.msk [vmem:[%s283 + $0x3c] sm:$0xf] %vm599, %v582
      %v616 = vld [vmem:[%s3] sm:$0xf]
      %v617 = vld [vmem:[%s3 + $0x4] sm:$0xf]
      %v618 = vld [vmem:[%s3 + $0x8] sm:$0xf]
      %v619 = vld [vmem:[%s3 + $0xc] sm:$0xf]
      %v624 = vunpack.c.l.b16 %v616
      %v625 = vunpack.c.l.b16 %v617
      %v626 = vunpack.c.l.b16 %v618
      %v627 = vunpack.c.l.b16 %v619
      %v628 = vpack.c.b16 %v625, %v624
      %v629 = vpack.c.b16 %v627, %v626
      %vm632 = vcmask 261120
      %v634 = vsel %vm632, %v535, 0
      %v637 = vsel %vm632, %v536, 0
      %v640 = vsel %vm632, %v537, 0
      %v643 = vsel %vm632, %v538, 0
      %v646 = vsel %vm632, %v539, 0
      %v649 = vsel %vm632, %v540, 0
      %v652 = vsel %vm632, %v541, 0
      %v655 = vsel %vm632, %v542, 0
      %657 = vmatprep.subr.bf16.mxu0 0
      %658 = vmatpush1.bf16.msra.mxu0 %v628
      %659 = vmatprep.subr.bf16.mxu0 0
      %660 = vmatpush1.bf16.msra.mxu0 %v629
      %661 = vmatprep.subr.bf16.mxu0 0
      %662 = vmatpush1.bf16.msra.mxu0 0
      %663 = vmatprep.subr.bf16.mxu0 0
      %664 = vmatpush1.bf16.msra.mxu0 0
      %665 = vmatprep.subr.bf16.mxu0 0
      %666 = vmatpush1.bf16.msra.mxu0 0
      %667 = vmatprep.subr.bf16.mxu0 0
      %668 = vmatpush1.bf16.msra.mxu0 0
      %669 = vmatprep.subr.bf16.mxu0 0
      %670 = vmatpush1.bf16.msra.mxu0 0
      %671 = vmatprep.subr.bf16.mxu0 0
      %672 = vmatpush1.bf16.msra.mxu0 0
      %673 = vmatprep.subr.bf16.mxu0 0
      %674 = vmatpush1.bf16.msra.mxu0 0
      %675 = vmatprep.subr.bf16.mxu0 0
      %676 = vmatpush1.bf16.msra.mxu0 0
      %677 = vmatprep.subr.bf16.mxu0 0
      %678 = vmatpush1.bf16.msra.mxu0 0
      %679 = vmatprep.subr.bf16.mxu0 0
      %680 = vmatpush1.bf16.msra.mxu0 0
      %681 = vmatprep.subr.bf16.mxu0 0
      %682 = vmatpush1.bf16.msra.mxu0 0
      %683 = vmatprep.subr.bf16.mxu0 0
      %684 = vmatpush1.bf16.msra.mxu0 0
      %685 = vmatprep.subr.bf16.mxu0 0
      %686 = vmatpush1.bf16.msra.mxu0 0
      %687 = vmatprep.subr.bf16.mxu0 0
      %688 = vmatpush1.bf16.msra.mxu0 0
      %689 = vmatprep.mubr.bf16.mxu0 0
      %690 = vmatmul.mubr.bf16.gmra.mrb[0].mxu0 %v634
      %v691 = vpop.f32.mrb[0].mxu0
      %v692 = vadd.f32 0.0, %v691
      %v693 = vpop.f32.mrb[0].mxu0
      %v694 = vpop.f32.mrb[0].mxu0
      %v695 = vadd.f32 0.0, %v694
      %v696 = vpop.f32.mrb[0].mxu0
      %697 = vmatprep.mubr.bf16.mxu0 0
      %698 = vmatmul.mubr.bf16.gmra.mrb[0].mxu0 %v637
      %v699 = vpop.f32.mrb[0].mxu0
      %v700 = vadd.f32 0.0, %v699
      %v701 = vpop.f32.mrb[0].mxu0
      %v702 = vpop.f32.mrb[0].mxu0
      %v703 = vadd.f32 0.0, %v702
      %v704 = vpop.f32.mrb[0].mxu0
      %705 = vmatprep.mubr.bf16.mxu0 0
      %706 = vmatmul.mubr.bf16.gmra.mrb[0].mxu0 %v640
      %v707 = vpop.f32.mrb[0].mxu0
      %v708 = vadd.f32 0.0, %v707
      %v709 = vpop.f32.mrb[0].mxu0
      %v710 = vpop.f32.mrb[0].mxu0
      %v711 = vadd.f32 0.0, %v710
      %v712 = vpop.f32.mrb[0].mxu0
      %713 = vmatprep.mubr.bf16.mxu0 0
      %714 = vmatmul.mubr.bf16.gmra.mrb[0].mxu0 %v643
      %v715 = vpop.f32.mrb[0].mxu0
      %v716 = vadd.f32 0.0, %v715
      %v717 = vpop.f32.mrb[0].mxu0
      %v718 = vpop.f32.mrb[0].mxu0
      %v719 = vadd.f32 0.0, %v718
      %v720 = vpop.f32.mrb[0].mxu0
      %721 = vmatprep.mubr.bf16.mxu0 0
      %722 = vmatmul.mubr.bf16.gmra.mrb[0].mxu0 %v646
      %v723 = vpop.f32.mrb[0].mxu0
      %v724 = vadd.f32 0.0, %v723
      %v725 = vpop.f32.mrb[0].mxu0
      %v726 = vpop.f32.mrb[0].mxu0
      %v727 = vadd.f32 0.0, %v726
      %v728 = vpop.f32.mrb[0].mxu0
      %729 = vmatprep.mubr.bf16.mxu0 0
      %730 = vmatmul.mubr.bf16.gmra.mrb[0].mxu0 %v649
      %v731 = vpop.f32.mrb[0].mxu0
      %v732 = vadd.f32 0.0, %v731
      %v733 = vpop.f32.mrb[0].mxu0
      %v734 = vpop.f32.mrb[0].mxu0
      %v735 = vadd.f32 0.0, %v734
      %v736 = vpop.f32.mrb[0].mxu0
      %737 = vmatprep.mubr.bf16.mxu0 0
      %738 = vmatmul.mubr.bf16.gmra.mrb[0].mxu0 %v652
      %v739 = vpop.f32.mrb[0].mxu0
      %v740 = vadd.f32 0.0, %v739
      %v741 = vpop.f32.mrb[0].mxu0
      %v742 = vpop.f32.mrb[0].mxu0
      %v743 = vadd.f32 0.0, %v742
      %v744 = vpop.f32.mrb[0].mxu0
      %745 = vmatprep.mubr.bf16.mxu0 0
      %746 = vmatmul.mubr.bf16.gmra.mrb[0].mxu0 %v655
      %v747 = vpop.f32.mrb[0].mxu0
      %v748 = vadd.f32 0.0, %v747
      %v749 = vpop.f32.mrb[0].mxu0
      %v750 = vpop.f32.mrb[0].mxu0
      %v751 = vadd.f32 0.0, %v750
      %v752 = vpop.f32.mrb[0].mxu0
      %753 = vdwg.mxu0
      %vm754 = vcmask 31744
      %755 = vst.msk [vmem:[%s289] sm:$0xff] %vm754, %v692
      %756 = vst.msk [vmem:[%s289 + $0x8] sm:$0xff] %vm754, %v695
      %757 = vst.msk [vmem:[%s289 + $0x10] sm:$0xff] %vm754, %v700
      %758 = vst.msk [vmem:[%s289 + $0x18] sm:$0xff] %vm754, %v703
      %759 = vst.msk [vmem:[%s289 + $0x20] sm:$0xff] %vm754, %v708
      %760 = vst.msk [vmem:[%s289 + $0x28] sm:$0xff] %vm754, %v711
      %761 = vst.msk [vmem:[%s289 + $0x30] sm:$0xff] %vm754, %v716
      %762 = vst.msk [vmem:[%s289 + $0x38] sm:$0xff] %vm754, %v719
      %763 = vst.msk [vmem:[%s289 + $0x40] sm:$0xff] %vm754, %v724
      %764 = vst.msk [vmem:[%s289 + $0x48] sm:$0xff] %vm754, %v727
      %765 = vst.msk [vmem:[%s289 + $0x50] sm:$0xff] %vm754, %v732
      %766 = vst.msk [vmem:[%s289 + $0x58] sm:$0xff] %vm754, %v735
      %767 = vst.msk [vmem:[%s289 + $0x60] sm:$0xff] %vm754, %v740
      %768 = vst.msk [vmem:[%s289 + $0x68] sm:$0xff] %vm754, %v743
      %769 = vst.msk [vmem:[%s289 + $0x70] sm:$0xff] %vm754, %v748
      %770 = vst.msk [vmem:[%s289 + $0x78] sm:$0xff] %vm754, %v751
      %s771 = smul.u32 16, %s18
      %p772 = scmp.lt.s32.totalorder %s771, 31
      %s773 = scalar_select %p772, %s771, 31
      %s774 = smul.addr %s773, 4
      %s775 = scalar_lea.vmem %s5, %s774
      %s776 = smul.u32 16, %s18
      %p777 = scmp.lt.s32.totalorder %s776, 31
      %s778 = scalar_select %p777, %s776, 31
      %s779 = smul.addr %s778, 8
      %s780 = scalar_lea.vmem %s6, %s779
      // Predicated region
      $region41: #{tpu_custom_call.1} parent=39 // pred_check
        %p781 = pneg %p151
      $region42: #{tpu_custom_call.1} parent=39 // pred_check_branch
        %783 = sbr.rel (%p781) target = $region44
      $region43: #{tpu_custom_call.1} parent=39 // pred_region
        %s784 = smul.u32 16, %s18
      $region44: #{tpu_custom_call.1} parent=39 // pred_fallthru
        _
      // Predicated region
      $region45: #{tpu_custom_call.1} parent=39 // pred_check
        %p785 = pneg %p177
      $region46: #{tpu_custom_call.1} parent=39 // pred_check_branch
        %787 = sbr.rel (%p785) target = $region48
      $region47: #{tpu_custom_call.1} parent=39 // pred_region
        %s788 = smul.u32 16, %s18
      $region48: #{tpu_custom_call.1} parent=39 // pred_fallthru
        _
    $region40: #{tpu_custom_call.1} parent=5 // pred_fallthru
      _
    %p789 = scmp.le.s32.totalorder 2, %s13
    // Predicated region
    $region49: #{tpu_custom_call.1} parent=5 // pred_check
      %p790 = pneg %p789
    $region50: #{tpu_custom_call.1} parent=5 // pred_check_branch
      %792 = sbr.rel (%p790) target = $region52
    $region51: #{tpu_custom_call.1} parent=5 // pred_region
      %s793 = ssub.s32 %s13, 2
      // Predicated region
      $region53: #{tpu_custom_call.1} parent=51 // pred_check
        %p794 = pneg %p157
      $region54: #{tpu_custom_call.1} parent=51 // pred_check_branch
        %796 = sbr.rel (%p794) target = $region56
      $region55: #{tpu_custom_call.1} parent=51 // pred_region
        %s797 = smul.u32 16, %s19
        %p798 = scmp.lt.s32.totalorder %s797, 31
        %s799 = scalar_select %p798, %s797, 31
        %s800 = smul.addr %s799, 4
        %s801 = scalar_lea.vmem %s5, %s800
      $region56: #{tpu_custom_call.1} parent=51 // pred_fallthru
        _
      // Predicated region
      $region57: #{tpu_custom_call.1} parent=51 // pred_check
        %p802 = pneg %p183
      $region58: #{tpu_custom_call.1} parent=51 // pred_check_branch
        %804 = sbr.rel (%p802) target = $region60
      $region59: #{tpu_custom_call.1} parent=51 // pred_region
        %s805 = smul.u32 16, %s19
        %p806 = scmp.lt.s32.totalorder %s805, 31
        %s807 = scalar_select %p806, %s805, 31
        %s808 = smul.addr %s807, 8
        %s809 = scalar_lea.vmem %s6, %s808
      $region60: #{tpu_custom_call.1} parent=51 // pred_fallthru
        _
    $region52: #{tpu_custom_call.1} parent=5 // pred_fallthru
      _
  $region6: #{tpu_custom_call.1} parent=0 // loop_footer
    %s17 = sadd.s32 1, %s13
  $region7: #{tpu_custom_call.1} parent=0 // loop_footer_branch
    %12 = sbr.rel target = $region3
  $region8: #{tpu_custom_call.1} parent=0 // loop_exit
    _

</llo_original>
